<compile_context>
chip_gen: v7x
topology: tpu7x:2x2x1
jax: 0.10.0
libtpu: 0.0.40
codegen_flags: <defaults>
</compile_context>

<pallas_src>
import functools
import math

import jax
import jax.numpy as jnp
from jax.experimental import pallas as pl
from jax.experimental.pallas import tpu as pltpu


def _encoder_kernel(idx_ref, tab_ref, zpos_ref, zhet_ref, opos_ref, ohet_ref,
                    *, bblk, n_sample, K):
    """One grid step = `bblk` batch elements = bblk*n_sample output rows.

    idx_ref : SMEM (B_pad,) int32 — table row per batch element (scalar prefetch)
    tab_ref : VMEM (N, 1, 2K+2) f32 — fused [pos_mean | het_mean | pos_sd | het_sd]
              table, resident across all grid steps (constant index_map).
    zpos_ref/opos_ref : VMEM (bblk*n_sample, K) blocks of the flattened noise/output
    zhet_ref/ohet_ref : VMEM (bblk*n_sample, 1) blocks
    """
    Kp = K + 1
    base = pl.program_id(0) * bblk
    # Static unroll over the batch elements of this block: every z/out slice is
    # static; only the table row index (SMEM scalar) and the leading-axis table
    # load are dynamic — both are cheap, well-supported patterns.
    for j in range(bblk):
        row = idx_ref[base + j]          # dynamic scalar read from SMEM
        trow = tab_ref[row]              # (1, 2*Kp) dynamic leading-axis load
        mean_p = trow[:, :K]
        mean_h = trow[:, K:Kp]
        sd_p = trow[:, Kp:Kp + K]
        sd_h = trow[:, Kp + K:Kp + Kp]
        lo = j * n_sample
        hi = lo + n_sample
        # (1,K)/(1,1) broadcast over the n_sample rows of this batch element.
        opos_ref[lo:hi, :] = mean_p + zpos_ref[lo:hi, :] * sd_p
        ohet_ref[lo:hi, :] = mean_h + zhet_ref[lo:hi, :] * sd_h


def _choose_batch_block(B, n_sample, *, target_rows=512, max_unroll=64):
    """Pick batch elements per grid step so row blocks are 8-aligned."""
    g = 8 // math.gcd(n_sample, 8)            # smallest bblk with 8-aligned rows
    bblk = (min(max(target_rows // n_sample, 1), max_unroll) // g) * g
    bblk = max(g, bblk)
    bblk = min(bblk, -(-B // g) * g)          # no bigger than the rounded-up batch
    if -(-B // bblk) < 2 and B > g:           # v7x: prefer >=2 parallel grid steps
        bblk = max(g, ((-(-B // 2)) // g) * g)
    return bblk


def encoder_forward(indices, params, z_pos, z_het):
    """Forward pass of Encoder.

    indices : (B,) int
    params  : {"mean": (N, K+1) f32, "log_sd": (N, K+1) f32} fused tables
              (columns 0..K-1 = latent_position encoder, column K = heterogeneity)
    z_pos   : (B, n_sample, K) f32 reparameterization noise
    z_het   : (B, n_sample, 1) f32 reparameterization noise
    Returns (latent_position (B, n_sample, K), latent_heterogeneity (B, n_sample, 1)).
    """
    B = indices.shape[0]
    _, n_sample, K = z_pos.shape
    N, Kp = params["mean"].shape
    assert Kp == K + 1 and z_het.shape == (B, n_sample, 1)
    R = B * n_sample

    # Fused, VMEM-resident table: [pos_mean(K) | het_mean(1) | pos_sd(K) | het_sd(1)].
    # exp() is done once per table row here (N*(K+1)) instead of per sample row.
    table = jnp.concatenate(
        [params["mean"], jnp.exp(params["log_sd"])], axis=1).reshape(N, 1, 2 * Kp)

    # TODO(synk): for very large N the resident table no longer fits VMEM;
    # switch back to a per-row gather through the BlockSpec index_map there.
    padded_table_bytes = N * 8 * (-(-(2 * Kp) // 128) * 128) * 4
    assert padded_table_bytes <= 16 * 1024 * 1024, "table too large for VMEM-resident path"

    # Indices live in SMEM (scalar prefetch). Clamp so a bad index can never
    # read outside the table (PyTorch would raise instead).
    idx = jnp.clip(indices.astype(jnp.int32), 0, N - 1)

    bblk = _choose_batch_block(B, n_sample)
    nblocks = -(-B // bblk)
    pad = nblocks * bblk - B
    if pad:
        idx = jnp.pad(idx, (0, pad))          # padded rows' writes are masked by Pallas

    rblk = bblk * n_sample
    # Flattened, sublane-dense 2D views of the noise (free reshapes, no concat).
    zpos2 = z_pos.reshape(R, K)
    zhet2 = z_het.reshape(R, 1)

    kernel = functools.partial(_encoder_kernel, bblk=bblk, n_sample=n_sample, K=K)

    grid_spec = pltpu.PrefetchScalarGridSpec(
        num_scalar_prefetch=1,
        grid=(nblocks,),
        in_specs=[
            # Full table, constant index map -> DMA'd once, resident across steps.
            pl.BlockSpec((N, 1, 2 * Kp), lambda i, idx_ref: (0, 0, 0)),
            pl.BlockSpec((rblk, K), lambda i, idx_ref: (i, 0)),
            pl.BlockSpec((rblk, 1), lambda i, idx_ref: (i, 0)),
        ],
        out_specs=[
            pl.BlockSpec((rblk, K), lambda i, idx_ref: (i, 0)),
            pl.BlockSpec((rblk, 1), lambda i, idx_ref: (i, 0)),
        ],
    )

    opos, ohet = pl.pallas_call(
        kernel,
        out_shape=(jax.ShapeDtypeStruct((R, K), jnp.float32),
                   jax.ShapeDtypeStruct((R, 1), jnp.float32)),
        grid_spec=grid_spec,
        compiler_params=pltpu.CompilerParams(
            dimension_semantics=("parallel",)),
        cost_estimate=pl.CostEstimate(
            flops=2 * R * Kp,
            transcendentals=0,
            bytes_accessed=4 * (2 * R * Kp + table.size + idx.size)),
    )(idx, table, zpos2, zhet2)

    # Free reshapes back to the module's (B, n_sample, .) outputs.
    return opos.reshape(B, n_sample, K), ohet.reshape(B, n_sample, 1)


def init_encoder_params(key, N, K):
    """Replicates PriorEncoder / Select __init__, stored as fused (N, K+1) tables."""
    k_pos, k_het = jax.random.split(key, 2)
    pos_bound = 1.0 / math.sqrt(N * K)      # Select((N, K))
    het_bound = 1.0 / math.sqrt(N * 1)      # Select((N, 1))
    mean = jnp.concatenate(
        [jax.random.normal(k_pos, (N, K), jnp.float32) * pos_bound,
         jax.random.normal(k_het, (N, 1), jnp.float32) * het_bound],
        axis=1)
    # log_sd_encoder.values filled with -2.0 for both encoders.
    log_sd = jnp.full((N, K + 1), -2.0, jnp.float32)
    return {"mean": mean, "log_sd": log_sd}


if __name__ == "__main__":
    key = jax.random.PRNGKey(0)
    k_param, k_idx, k_zpos, k_zhet = jax.random.split(key, 4)

    N, K = 16, 8          # Encoder(K=8, N=16)
    B, n_sample = 4, 2

    params = init_encoder_params(k_param, N, K)
    indices = jax.random.randint(k_idx, (B,), 0, N, dtype=jnp.int32)
    # Reparameterization noise (torch.randn in the reference), passed in
    # explicitly so the kernel itself is deterministic.
    z_pos = jax.random.normal(k_zpos, (B, n_sample, K), jnp.float32)
    z_het = jax.random.normal(k_zhet, (B, n_sample, 1), jnp.float32)

    latent_position, latent_heterogeneity = encoder_forward(
        indices, params, z_pos, z_het)
    jax.block_until_ready((latent_position, latent_heterogeneity))

    # Reference in plain JAX, mirroring the PyTorch module (separate encoders).
    pos_mean, het_mean = params["mean"][:, :K], params["mean"][:, K:]
    pos_log_sd, het_log_sd = params["log_sd"][:, :K], params["log_sd"][:, K:]
    ref_pos = (pos_mean[indices][:, None, :]
               + z_pos * jnp.exp(pos_log_sd[indices])[:, None, :])
    ref_het = (het_mean[indices][:, None, :]
               + z_het * jnp.exp(het_log_sd[indices])[:, None, :])
    assert jnp.allclose(latent_position, ref_pos, atol=1e-5)
    assert jnp.allclose(latent_heterogeneity, ref_het, atol=1e-5)
    assert latent_position.shape == (B, n_sample, K)
    assert latent_heterogeneity.shape == (B, n_sample, 1)

    print("KERNEL_OK")
</pallas_src>

<mosaic_0001>
module attributes {stable_mosaic.version = 11 : i64} {
  func.func @_encoder_kernel(%arg0: i32, %arg1: memref<4xi32, #tpu.memory_space<smem>>, %arg2: memref<16x1x18xf32, #tpu.memory_space<vmem>>, %arg3: memref<8x8xf32, #tpu.memory_space<vmem>>, %arg4: memref<8x1xf32, #tpu.memory_space<vmem>>, %arg5: memref<8x8xf32, #tpu.memory_space<vmem>>, %arg6: memref<8x1xf32, #tpu.memory_space<vmem>>) attributes {dimension_semantics = [#tpu.dimension_semantics<parallel>], iteration_bounds = array<i64: 1>, scalar_prefetch = 1 : i64, scratch_operands = 0 : i64, tpu.core_type = #tpu.core_type<tc>, window_params = [{pipeline_mode = #tpu.pipeline_mode<synchronous>, transform_indices = @transform_0, window_bounds = array<i64: 16, 1, 18>}, {transform_indices = @transform_1, window_bounds = array<i64: 8, 8>}, {transform_indices = @transform_2, window_bounds = array<i64: 8, 1>}, {transform_indices = @transform_3, window_bounds = array<i64: 8, 8>}, {transform_indices = @transform_4, window_bounds = array<i64: 8, 1>}]} {
    %c4_i32 = arith.constant 4 : i32
    %0 = arith.muli %arg0, %c4_i32 : i32
    %c0_i32 = arith.constant 0 : i32
    %1 = arith.addi %0, %c0_i32 : i32
    %2 = arith.index_cast %1 : i32 to index
    %3 = memref.load %arg1[%2] : memref<4xi32, #tpu.memory_space<smem>>
    %4 = arith.index_cast %3 : i32 to index
    %c0 = arith.constant 0 : index
    %c0_0 = arith.constant 0 : index
    %5 = vector.load %arg2[%4, %c0, %c0_0] : memref<16x1x18xf32, #tpu.memory_space<vmem>>, vector<1x1x18xf32>
    %6 = vector.shape_cast %5 : vector<1x1x18xf32> to vector<1x18xf32>
    %7 = vector.extract_strided_slice %6 {offsets = [0, 0], sizes = [1, 8], strides = [1, 1]} : vector<1x18xf32> to vector<1x8xf32>
    %8 = vector.extract_strided_slice %6 {offsets = [0, 8], sizes = [1, 1], strides = [1, 1]} : vector<1x18xf32> to vector<1x1xf32>
    %9 = vector.extract_strided_slice %6 {offsets = [0, 9], sizes = [1, 8], strides = [1, 1]} : vector<1x18xf32> to vector<1x8xf32>
    %10 = vector.extract_strided_slice %6 {offsets = [0, 17], sizes = [1, 1], strides = [1, 1]} : vector<1x18xf32> to vector<1x1xf32>
    %c0_1 = arith.constant 0 : index
    %c0_2 = arith.constant 0 : index
    %11 = vector.load %arg3[%c0_1, %c0_2] : memref<8x8xf32, #tpu.memory_space<vmem>>, vector<2x8xf32>
    %12 = vector.broadcast %9 : vector<1x8xf32> to vector<2x8xf32>
    %13 = arith.mulf %11, %12 : vector<2x8xf32>
    %14 = vector.broadcast %7 : vector<1x8xf32> to vector<2x8xf32>
    %15 = arith.addf %14, %13 : vector<2x8xf32>
    %c0_3 = arith.constant 0 : index
    %c0_4 = arith.constant 0 : index
    %16 = vector.load %arg5[%c0_3, %c0_4] : memref<8x8xf32, #tpu.memory_space<vmem>>, vector<2x8xf32>
    tpu.vector_store %arg5[%c0_3, %c0_4], %15 {strides = array<i32>} : memref<8x8xf32, #tpu.memory_space<vmem>>, vector<2x8xf32>,
    %c0_5 = arith.constant 0 : index
    %c0_6 = arith.constant 0 : index
    %17 = vector.load %arg4[%c0_5, %c0_6] : memref<8x1xf32, #tpu.memory_space<vmem>>, vector<2x1xf32>
    %18 = vector.broadcast %10 : vector<1x1xf32> to vector<2x1xf32>
    %19 = arith.mulf %17, %18 : vector<2x1xf32>
    %20 = vector.broadcast %8 : vector<1x1xf32> to vector<2x1xf32>
    %21 = arith.addf %20, %19 : vector<2x1xf32>
    %c0_7 = arith.constant 0 : index
    %c0_8 = arith.constant 0 : index
    %22 = vector.load %arg6[%c0_7, %c0_8] : memref<8x1xf32, #tpu.memory_space<vmem>>, vector<2x1xf32>
    tpu.vector_store %arg6[%c0_7, %c0_8], %21 {strides = array<i32>} : memref<8x1xf32, #tpu.memory_space<vmem>>, vector<2x1xf32>,
    %c1_i32 = arith.constant 1 : i32
    %23 = arith.addi %0, %c1_i32 : i32
    %24 = arith.index_cast %23 : i32 to index
    %25 = memref.load %arg1[%24] : memref<4xi32, #tpu.memory_space<smem>>
    %26 = arith.index_cast %25 : i32 to index
    %c0_9 = arith.constant 0 : index
    %c0_10 = arith.constant 0 : index
    %27 = vector.load %arg2[%26, %c0_9, %c0_10] : memref<16x1x18xf32, #tpu.memory_space<vmem>>, vector<1x1x18xf32>
    %28 = vector.shape_cast %27 : vector<1x1x18xf32> to vector<1x18xf32>
    %29 = vector.extract_strided_slice %28 {offsets = [0, 0], sizes = [1, 8], strides = [1, 1]} : vector<1x18xf32> to vector<1x8xf32>
    %30 = vector.extract_strided_slice %28 {offsets = [0, 8], sizes = [1, 1], strides = [1, 1]} : vector<1x18xf32> to vector<1x1xf32>
    %31 = vector.extract_strided_slice %28 {offsets = [0, 9], sizes = [1, 8], strides = [1, 1]} : vector<1x18xf32> to vector<1x8xf32>
    %32 = vector.extract_strided_slice %28 {offsets = [0, 17], sizes = [1, 1], strides = [1, 1]} : vector<1x18xf32> to vector<1x1xf32>
    %c2 = arith.constant 2 : index
    %c0_11 = arith.constant 0 : index
    %33 = vector.load %arg3[%c2, %c0_11] : memref<8x8xf32, #tpu.memory_space<vmem>>, vector<2x8xf32>
    %34 = vector.broadcast %31 : vector<1x8xf32> to vector<2x8xf32>
    %35 = arith.mulf %33, %34 : vector<2x8xf32>
    %36 = vector.broadcast %29 : vector<1x8xf32> to vector<2x8xf32>
    %37 = arith.addf %36, %35 : vector<2x8xf32>
    %c2_12 = arith.constant 2 : index
    %c0_13 = arith.constant 0 : index
    %38 = vector.load %arg5[%c2_12, %c0_13] : memref<8x8xf32, #tpu.memory_space<vmem>>, vector<2x8xf32>
    tpu.vector_store %arg5[%c2_12, %c0_13], %37 {strides = array<i32>} : memref<8x8xf32, #tpu.memory_space<vmem>>, vector<2x8xf32>,
    %c2_14 = arith.constant 2 : index
    %c0_15 = arith.constant 0 : index
    %39 = vector.load %arg4[%c2_14, %c0_15] : memref<8x1xf32, #tpu.memory_space<vmem>>, vector<2x1xf32>
    %40 = vector.broadcast %32 : vector<1x1xf32> to vector<2x1xf32>
    %41 = arith.mulf %39, %40 : vector<2x1xf32>
    %42 = vector.broadcast %30 : vector<1x1xf32> to vector<2x1xf32>
    %43 = arith.addf %42, %41 : vector<2x1xf32>
    %c2_16 = arith.constant 2 : index
    %c0_17 = arith.constant 0 : index
    %44 = vector.load %arg6[%c2_16, %c0_17] : memref<8x1xf32, #tpu.memory_space<vmem>>, vector<2x1xf32>
    tpu.vector_store %arg6[%c2_16, %c0_17], %43 {strides = array<i32>} : memref<8x1xf32, #tpu.memory_space<vmem>>, vector<2x1xf32>,
    %c2_i32 = arith.constant 2 : i32
    %45 = arith.addi %0, %c2_i32 : i32
    %46 = arith.index_cast %45 : i32 to index
    %47 = memref.load %arg1[%46] : memref<4xi32, #tpu.memory_space<smem>>
    %48 = arith.index_cast %47 : i32 to index
    %c0_18 = arith.constant 0 : index
    %c0_19 = arith.constant 0 : index
    %49 = vector.load %arg2[%48, %c0_18, %c0_19] : memref<16x1x18xf32, #tpu.memory_space<vmem>>, vector<1x1x18xf32>
    %50 = vector.shape_cast %49 : vector<1x1x18xf32> to vector<1x18xf32>
    %51 = vector.extract_strided_slice %50 {offsets = [0, 0], sizes = [1, 8], strides = [1, 1]} : vector<1x18xf32> to vector<1x8xf32>
    %52 = vector.extract_strided_slice %50 {offsets = [0, 8], sizes = [1, 1], strides = [1, 1]} : vector<1x18xf32> to vector<1x1xf32>
    %53 = vector.extract_strided_slice %50 {offsets = [0, 9], sizes = [1, 8], strides = [1, 1]} : vector<1x18xf32> to vector<1x8xf32>
    %54 = vector.extract_strided_slice %50 {offsets = [0, 17], sizes = [1, 1], strides = [1, 1]} : vector<1x18xf32> to vector<1x1xf32>
    %c4 = arith.constant 4 : index
    %c0_20 = arith.constant 0 : index
    %55 = vector.load %arg3[%c4, %c0_20] : memref<8x8xf32, #tpu.memory_space<vmem>>, vector<2x8xf32>
    %56 = vector.broadcast %53 : vector<1x8xf32> to vector<2x8xf32>
    %57 = arith.mulf %55, %56 : vector<2x8xf32>
    %58 = vector.broadcast %51 : vector<1x8xf32> to vector<2x8xf32>
    %59 = arith.addf %58, %57 : vector<2x8xf32>
    %c4_21 = arith.constant 4 : index
    %c0_22 = arith.constant 0 : index
    %60 = vector.load %arg5[%c4_21, %c0_22] : memref<8x8xf32, #tpu.memory_space<vmem>>, vector<2x8xf32>
    tpu.vector_store %arg5[%c4_21, %c0_22], %59 {strides = array<i32>} : memref<8x8xf32, #tpu.memory_space<vmem>>, vector<2x8xf32>,
    %c4_23 = arith.constant 4 : index
    %c0_24 = arith.constant 0 : index
    %61 = vector.load %arg4[%c4_23, %c0_24] : memref<8x1xf32, #tpu.memory_space<vmem>>, vector<2x1xf32>
    %62 = vector.broadcast %54 : vector<1x1xf32> to vector<2x1xf32>
    %63 = arith.mulf %61, %62 : vector<2x1xf32>
    %64 = vector.broadcast %52 : vector<1x1xf32> to vector<2x1xf32>
    %65 = arith.addf %64, %63 : vector<2x1xf32>
    %c4_25 = arith.constant 4 : index
    %c0_26 = arith.constant 0 : index
    %66 = vector.load %arg6[%c4_25, %c0_26] : memref<8x1xf32, #tpu.memory_space<vmem>>, vector<2x1xf32>
    tpu.vector_store %arg6[%c4_25, %c0_26], %65 {strides = array<i32>} : memref<8x1xf32, #tpu.memory_space<vmem>>, vector<2x1xf32>,
    %c3_i32 = arith.constant 3 : i32
    %67 = arith.addi %0, %c3_i32 : i32
    %68 = arith.index_cast %67 : i32 to index
    %69 = memref.load %arg1[%68] : memref<4xi32, #tpu.memory_space<smem>>
    %70 = arith.index_cast %69 : i32 to index
    %c0_27 = arith.constant 0 : index
    %c0_28 = arith.constant 0 : index
    %71 = vector.load %arg2[%70, %c0_27, %c0_28] : memref<16x1x18xf32, #tpu.memory_space<vmem>>, vector<1x1x18xf32>
    %72 = vector.shape_cast %71 : vector<1x1x18xf32> to vector<1x18xf32>
    %73 = vector.extract_strided_slice %72 {offsets = [0, 0], sizes = [1, 8], strides = [1, 1]} : vector<1x18xf32> to vector<1x8xf32>
    %74 = vector.extract_strided_slice %72 {offsets = [0, 8], sizes = [1, 1], strides = [1, 1]} : vector<1x18xf32> to vector<1x1xf32>
    %75 = vector.extract_strided_slice %72 {offsets = [0, 9], sizes = [1, 8], strides = [1, 1]} : vector<1x18xf32> to vector<1x8xf32>
    %76 = vector.extract_strided_slice %72 {offsets = [0, 17], sizes = [1, 1], strides = [1, 1]} : vector<1x18xf32> to vector<1x1xf32>
    %c6 = arith.constant 6 : index
    %c0_29 = arith.constant 0 : index
    %77 = vector.load %arg3[%c6, %c0_29] : memref<8x8xf32, #tpu.memory_space<vmem>>, vector<2x8xf32>
    %78 = vector.broadcast %75 : vector<1x8xf32> to vector<2x8xf32>
    %79 = arith.mulf %77, %78 : vector<2x8xf32>
    %80 = vector.broadcast %73 : vector<1x8xf32> to vector<2x8xf32>
    %81 = arith.addf %80, %79 : vector<2x8xf32>
    %c6_30 = arith.constant 6 : index
    %c0_31 = arith.constant 0 : index
    %82 = vector.load %arg5[%c6_30, %c0_31] : memref<8x8xf32, #tpu.memory_space<vmem>>, vector<2x8xf32>
    tpu.vector_store %arg5[%c6_30, %c0_31], %81 {strides = array<i32>} : memref<8x8xf32, #tpu.memory_space<vmem>>, vector<2x8xf32>,
    %c6_32 = arith.constant 6 : index
    %c0_33 = arith.constant 0 : index
    %83 = vector.load %arg4[%c6_32, %c0_33] : memref<8x1xf32, #tpu.memory_space<vmem>>, vector<2x1xf32>
    %84 = vector.broadcast %76 : vector<1x1xf32> to vector<2x1xf32>
    %85 = arith.mulf %83, %84 : vector<2x1xf32>
    %86 = vector.broadcast %74 : vector<1x1xf32> to vector<2x1xf32>
    %87 = arith.addf %86, %85 : vector<2x1xf32>
    %c6_34 = arith.constant 6 : index
    %c0_35 = arith.constant 0 : index
    %88 = vector.load %arg6[%c6_34, %c0_35] : memref<8x1xf32, #tpu.memory_space<vmem>>, vector<2x1xf32>
    tpu.vector_store %arg6[%c6_34, %c0_35], %87 {strides = array<i32>} : memref<8x1xf32, #tpu.memory_space<vmem>>, vector<2x1xf32>,
    return
  }
  func.func @transform_0(%arg0: i32, %arg1: memref<4xi32, #tpu.memory_space<smem>>) -> (i32, i32, i32) {
    %c0_i32 = arith.constant 0 : i32
    %c0_i32_0 = arith.constant 0 : i32
    %c0_i32_1 = arith.constant 0 : i32
    %c0_i32_2 = arith.constant 0 : i32
    return %c0_i32, %c0_i32_0, %c0_i32_1 : i32, i32, i32
  }
  func.func @transform_1(%arg0: i32, %arg1: memref<4xi32, #tpu.memory_space<smem>>) -> (i32, i32) {
    %c0_i32 = arith.constant 0 : i32
    %c0_i32_0 = arith.constant 0 : i32
    return %arg0, %c0_i32 : i32, i32
  }
  func.func @transform_2(%arg0: i32, %arg1: memref<4xi32, #tpu.memory_space<smem>>) -> (i32, i32) {
    %c0_i32 = arith.constant 0 : i32
    %c0_i32_0 = arith.constant 0 : i32
    return %arg0, %c0_i32 : i32, i32
  }
  func.func @transform_3(%arg0: i32, %arg1: memref<4xi32, #tpu.memory_space<smem>>) -> (i32, i32) {
    %c0_i32 = arith.constant 0 : i32
    %c0_i32_0 = arith.constant 0 : i32
    return %arg0, %c0_i32 : i32, i32
  }
  func.func @transform_4(%arg0: i32, %arg1: memref<4xi32, #tpu.memory_space<smem>>) -> (i32, i32) {
    %c0_i32 = arith.constant 0 : i32
    %c0_i32_0 = arith.constant 0 : i32
    return %arg0, %c0_i32 : i32, i32
  }
}

</mosaic_0001>

<llo_original>
// kernel: tpu_custom_call.1
$region0: #{tpu_custom_call.1}
  #allocation0 [shape = 'u32[]', space=smem, size = 0x4, offset = 0x4, fixed_abs, tag = 'smem constant byte address 0x4 - core index']
  #allocation1 [shape = 'u32[144,128]{1,0:T(1,128)}', space=vmem, size = 0x12000, scoped, tag = 'internal scratch']
  #allocation2 [shape = 's32[1]{0}', space=sflag, size = 0x4, scoped, tag = 'scoped memory for tpu_custom_call.1']
  #allocation3 [shape = 'u8[512]{0}', space=smem, size = 0x200, scoped, tag = 'prefetched SMEM operand 0']
  %s0 = inlined_call_operand.vmem [shape: s32[4], index: 0, kind: input, shape index: {}]
  %s1 = inlined_call_operand.hbm [shape: f32[16,1,18], index: 1, kind: input, shape index: {}]
  %s2 = inlined_call_operand.vmem [shape: f32[8,8], index: 2, kind: input, shape index: {}]
  %s3 = inlined_call_operand.vmem [shape: f32[8,1], index: 3, kind: input, shape index: {}]
  %s4 = inlined_call_operand.hbm [shape: f32[8,8], index: 4, kind: output, shape index: {0}]
  %s5 = inlined_call_operand.vmem [shape: f32[8,1], index: 5, kind: output, shape index: {1}]
  %6 = xla_tuple %s4, %s5
  %s7 = sld [smem:[#allocation0]]
  $region34: #{tpu_custom_call.1} parent=0
    _
  %s9 = ssub.s32 1, %s7
  %s10 = scalar_select 0, %s9, %s7
  %s11 = sshll.u32 %s0, 4
  %s12 = int_to_ptr.vmem [resolvable:$true] %s11
  %14 = dma.vmem_to_smem %s12, 16, [#allocation3], [#allocation2]
  %15 = dma.done [#allocation2], 16
  %16 = sfence
  $region1: #{tpu_custom_call.1} parent=0
    #allocation4 [shape = 'u8[8192]{0}', space=vmem, size = 0x2000, scoped, tag = 'input window, operand 1, single buffered']
    #allocation5 [shape = 's32[1]{0}', space=sflag, size = 0x4, scoped, tag = 'scoped memory for tpu_custom_call.1']
    #allocation6 [shape = 's32[1]{0}', space=sflag, size = 0x4, scoped, tag = 'scoped memory for tpu_custom_call.1']
    #allocation7 [shape = 'u8[4096]{0}', space=vmem, size = 0x1000, scoped, tag = 'output window, operand 0, single buffered']
    %17 = vsyncpa [#allocation5], 0
    %18 = vsyncpa [#allocation6], 0
    // Predicated region
    $region2: #{tpu_custom_call.1} parent=1 // pred_check
      _
    $region3: #{tpu_custom_call.1} parent=1 // pred_check_branch
      %20 = sbr.rel (0) target = $region5
    $region4: #{tpu_custom_call.1} parent=1 // pred_region
      %s22 = ssub.s32 256, 256
      %23 = vsyncadd [#allocation5], %s22
      %s24 = sshll.u32 [#allocation4], 4
      %s25 = int_to_ptr.vmem [resolvable:$true] %s24
      %30 = dma.hbm_to_vmem [thread:$0]  %s1, 256, %s25, [#allocation5], 16, 16, 1
    $region5: #{tpu_custom_call.1} parent=1 // pred_fallthru
      _
    // Predicated region
    $region6: #{tpu_custom_call.1} parent=1 // pred_check
      _
    $region7: #{tpu_custom_call.1} parent=1 // pred_check_branch
      %32 = sbr.rel (0) target = $region9
    $region8: #{tpu_custom_call.1} parent=1 // pred_region
      _
    $region9: #{tpu_custom_call.1} parent=1 // pred_fallthru
      _
    // Predicated region
    $region10: #{tpu_custom_call.1} parent=1 // pred_check
      _
    $region11: #{tpu_custom_call.1} parent=1 // pred_check_branch
      %34 = sbr.rel (0) target = $region13
    $region12: #{tpu_custom_call.1} parent=1 // pred_region
      _
    $region13: #{tpu_custom_call.1} parent=1 // pred_fallthru
      _
    // Predicated region
    $region14: #{tpu_custom_call.1} parent=1 // pred_check
      _
    $region15: #{tpu_custom_call.1} parent=1 // pred_check_branch
      %36 = sbr.rel (0) target = $region17
    $region16: #{tpu_custom_call.1} parent=1 // pred_region
      %37 = dma.done [#allocation5], 256
    $region17: #{tpu_custom_call.1} parent=1 // pred_fallthru
      _
    %s38 = smul.u32 0, 4
    %s39 = sld [smem:[#allocation3 + %s38]]
    %s40 = scalar_lea.vmem [#allocation4], %s39
    %v41 = vld [vmem:[%s40] sm:$0x1]
    %v42 = vld [vmem:[%s2] sm:$0x3]
    %v44 = vlaneseq
    %v45 = vshrl.u32 %v44, 7
    %v46 = vsub.s32 0, %v45
    %v47 = vrot.slane %v41, %v46
    %48 = vrot.lane.b32.xlu0 %v47, 119
    %v49 = vpop.permute.xlu0 %48
    %v51 = vmul.f32 %v42, %v49
    %v53 = vadd.f32 %v47, %v51
    %vm54 = vcmask 58368
    %55 = vst.msk [vmem:[#allocation7] sm:$0x3] %vm54, %v53
    %v56 = vld [vmem:[%s3] sm:$0x3]
    %57 = vrot.lane.b32.xlu0 %v47, 111
    %v58 = vpop.permute.xlu0 %57
    %v60 = vmul.f32 %v56, %v58
    %62 = vrot.lane.b32.xlu0 %v60, 8
    %v63 = vpop.permute.xlu0 %62
    %v65 = vadd.f32 %v47, %v63
    %67 = vrot.lane.b32.xlu0 %v65, 120
    %v68 = vpop.permute.xlu0 %67
    %vm70 = vcmask 1024
    %71 = vst.msk [vmem:[%s5] sm:$0x3] %vm70, %v68
    %s72 = sadd.s32 %s38, 1
    %s73 = sld [smem:[#allocation3 + %s72]]
    %s74 = scalar_lea.vmem [#allocation4], %s73
    %v75 = vld [vmem:[%s74] sm:$0x1]
    %v76 = vld [vmem:[%s2 + $0x2] sm:$0x3]
    %v78 = vlaneseq
    %v79 = vshrl.u32 %v78, 7
    %v80 = vsub.s32 0, %v79
    %v81 = vrot.slane %v75, %v80
    %82 = vrot.lane.b32.xlu0 %v81, 119
    %v83 = vpop.permute.xlu0 %82
    %v85 = vmul.f32 %v76, %v83
    %v87 = vadd.f32 %v81, %v85
    %88 = vst.msk [vmem:[#allocation7 + $0x2] sm:$0x3] %vm54, %v87
    %v89 = vld [vmem:[%s3 + $0x2] sm:$0x3]
    %90 = vrot.lane.b32.xlu0 %v81, 111
    %v91 = vpop.permute.xlu0 %90
    %v93 = vmul.f32 %v89, %v91
    %95 = vrot.lane.b32.xlu0 %v93, 8
    %v96 = vpop.permute.xlu0 %95
    %v98 = vadd.f32 %v81, %v96
    %100 = vrot.lane.b32.xlu0 %v98, 120
    %v101 = vpop.permute.xlu0 %100
    %103 = vst.msk [vmem:[%s5 + $0x2] sm:$0x3] %vm70, %v101
    %s104 = sadd.s32 %s38, 2
    %s105 = sld [smem:[#allocation3 + %s104]]
    %s106 = scalar_lea.vmem [#allocation4], %s105
    %v107 = vld [vmem:[%s106] sm:$0x1]
    %v108 = vld [vmem:[%s2 + $0x4] sm:$0x3]
    %v110 = vlaneseq
    %v111 = vshrl.u32 %v110, 7
    %v112 = vsub.s32 0, %v111
    %v113 = vrot.slane %v107, %v112
    %114 = vrot.lane.b32.xlu0 %v113, 119
    %v115 = vpop.permute.xlu0 %114
    %v117 = vmul.f32 %v108, %v115
    %v119 = vadd.f32 %v113, %v117
    %120 = vst.msk [vmem:[#allocation7 + $0x4] sm:$0x3] %vm54, %v119
    %v121 = vld [vmem:[%s3 + $0x4] sm:$0x3]
    %122 = vrot.lane.b32.xlu0 %v113, 111
    %v123 = vpop.permute.xlu0 %122
    %v125 = vmul.f32 %v121, %v123
    %127 = vrot.lane.b32.xlu0 %v125, 8
    %v128 = vpop.permute.xlu0 %127
    %v130 = vadd.f32 %v113, %v128
    %132 = vrot.lane.b32.xlu0 %v130, 120
    %v133 = vpop.permute.xlu0 %132
    %135 = vst.msk [vmem:[%s5 + $0x4] sm:$0x3] %vm70, %v133
    %s136 = sadd.s32 %s38, 3
    %s137 = sld [smem:[#allocation3 + %s136]]
    %s138 = scalar_lea.vmem [#allocation4], %s137
    %v139 = vld [vmem:[%s138] sm:$0x1]
    %v140 = vld [vmem:[%s2 + $0x6] sm:$0x3]
    %v142 = vlaneseq
    %v143 = vshrl.u32 %v142, 7
    %v144 = vsub.s32 0, %v143
    %v145 = vrot.slane %v139, %v144
    %146 = vrot.lane.b32.xlu0 %v145, 119
    %v147 = vpop.permute.xlu0 %146
    %v149 = vmul.f32 %v140, %v147
    %v151 = vadd.f32 %v145, %v149
    %152 = vst.msk [vmem:[#allocation7 + $0x6] sm:$0x3] %vm54, %v151
    %v153 = vld [vmem:[%s3 + $0x6] sm:$0x3]
    %154 = vrot.lane.b32.xlu0 %v145, 111
    %v155 = vpop.permute.xlu0 %154
    %v157 = vmul.f32 %v153, %v155
    %159 = vrot.lane.b32.xlu0 %v157, 8
    %v160 = vpop.permute.xlu0 %159
    %v162 = vadd.f32 %v145, %v160
    %164 = vrot.lane.b32.xlu0 %v162, 120
    %v165 = vpop.permute.xlu0 %164
    %167 = vst.msk [vmem:[%s5 + $0x6] sm:$0x3] %vm70, %v165
    // Predicated region
    $region18: #{tpu_custom_call.1} parent=1 // pred_check
      _
    $region19: #{tpu_custom_call.1} parent=1 // pred_check_branch
      %169 = sbr.rel (0) target = $region21
    $region20: #{tpu_custom_call.1} parent=1 // pred_region
      %s171 = ssub.s32 128, 128
      %172 = vsyncadd [#allocation6], %s171
      %s174 = sshll.u32 [#allocation7], 4
      %s175 = int_to_ptr.vmem [resolvable:$true] %s174
      %177 = dma.vmem_to_hbm [thread:$0]  %s175, 128, %s4, [#allocation6]
    $region21: #{tpu_custom_call.1} parent=1 // pred_fallthru
      _
    // Predicated region
    $region22: #{tpu_custom_call.1} parent=1 // pred_check
      _
    $region23: #{tpu_custom_call.1} parent=1 // pred_check_branch
      %179 = sbr.rel (0) target = $region25
    $region24: #{tpu_custom_call.1} parent=1 // pred_region
      _
    $region25: #{tpu_custom_call.1} parent=1 // pred_fallthru
      _
    // Predicated region
    $region26: #{tpu_custom_call.1} parent=1 // pred_check
      _
    $region27: #{tpu_custom_call.1} parent=1 // pred_check_branch
      %181 = sbr.rel (0) target = $region29
    $region28: #{tpu_custom_call.1} parent=1 // pred_region
      %182 = dma.done [#allocation6], 128
    $region29: #{tpu_custom_call.1} parent=1 // pred_fallthru
      _
    // Predicated region
    $region30: #{tpu_custom_call.1} parent=1 // pred_check
      _
    $region31: #{tpu_custom_call.1} parent=1 // pred_check_branch
      %184 = sbr.rel (0) target = $region33
    $region32: #{tpu_custom_call.1} parent=1 // pred_region
      _
    $region33: #{tpu_custom_call.1} parent=1 // pred_fallthru
      _
    %185 = vsyncpa [#allocation5], 1
    %186 = vsyncpa [#allocation6], 1

</llo_original>
